<compile_context>
chip_gen: v6e
topology: v6e:2x2x1
jax: 0.10.0
libtpu: 0.0.40
codegen_flags: <defaults>
</compile_context>

<pallas_src>
import functools
import math

import jax
import jax.numpy as jnp
from jax.experimental import pallas as pl
from jax.experimental.pallas import tpu as pltpu


def _round_up(n: int, m: int) -> int:
    return ((n + m - 1) // m) * m


def _linear_kernel(x_ref, wt_ref, b_ref, y_ref):
    # x_ref : (TM, D)  batch tile (streamed / pipelined)
    # wt_ref: (D, TN)  pre-transposed weight tile (constant index across batch tiles)
    # b_ref : (1, TN)  bias tile (f32)
    # y_ref : (TM, TN) output tile (lane-dense: TN is a multiple of 128)
    acc = jnp.dot(x_ref[...], wt_ref[...], preferred_element_type=jnp.float32)
    y_ref[...] = (acc + b_ref[...]).astype(y_ref.dtype)


def feat_classifier_xy_forward(x, weight, bias, *, tm: int = 512, tn: int = 512,
                               use_bf16: bool = False, force_pallas: bool = False,
                               small_work_threshold: int = 1 << 20):
    """Mirrors feat_classifier_xy.forward: returns (x, y) with y = x @ W^T + b.

    x:      (B, D) float32
    weight: (C, D) float32   (PyTorch nn.Linear weight layout)
    bias:   (C,)   float32
    """
    B, D = x.shape
    C = weight.shape[0]

    # Tiny classifier heads: fixed pallas_call launch + padding overhead dwarfs the
    # math, so fall back to plain XLA unless the Pallas path is explicitly forced.
    if not force_pallas and (B * D * max(C, 1)) < small_work_threshold:
        y = (x @ weight.T + bias).astype(x.dtype)
        return x, y

    # Class padding: 128 keeps stores lane-dense; 256 when C > 128 keeps the MXU
    # N dimension fully occupied on v6e/v7x (2x256^2 tiles). Padded cols are zero
    # and sliced off -> numerics unchanged.
    Cp = _round_up(C, 128) if C <= 128 else _round_up(C, 256)
    # Batch padded only to the f32 sublane multiple; partial last batch tile is
    # handled by Pallas boundary masking (no inflation to a full extra TM).
    Bp = _round_up(B, 8)

    TM = min(tm, Bp)
    if Cp <= tn:
        TN = Cp
    else:
        # Largest candidate tile that divides Cp -> every class tile is full width
        # (no masked vst on the lane dim) and the weight block stays VMEM-bounded.
        TN = max(t for t in (512, 384, 256, 128) if t <= tn and Cp % t == 0)

    grid_m = pl.cdiv(Bp, TM)
    grid_n = Cp // TN

    compute_dtype = jnp.bfloat16 if use_bf16 else x.dtype

    x_p = x if Bp == B else jnp.pad(x, ((0, Bp - B), (0, 0)))
    x_p = x_p.astype(compute_dtype)

    # Transpose the weight ONCE outside the kernel: (C, D) -> (D, Cp).
    w_t = weight.T
    if Cp != C:
        w_t = jnp.pad(w_t, ((0, 0), (0, Cp - C)))
    w_t = w_t.astype(compute_dtype)

    b_p = bias if Cp == C else jnp.pad(bias, (0, Cp - C))
    b_p = b_p.reshape(1, Cp).astype(jnp.float32)

    itemsize = jnp.dtype(compute_dtype).itemsize
    # Double-buffered x/y tiles + weight/bias tiles, with headroom.
    blk_bytes = (TM * D + D * TN) * itemsize + (TN + TM * TN) * 4
    vmem_limit = int(min(max(4 * blk_bytes, 32 * 1024 * 1024), 64 * 1024 * 1024))

    cost = pl.CostEstimate(
        flops=2 * Bp * D * Cp,
        transcendentals=0,
        bytes_accessed=(Bp * D + D * Cp + Cp + Bp * Cp) * 4,
    )

    y_p = pl.pallas_call(
        _linear_kernel,
        out_shape=jax.ShapeDtypeStruct((Bp, Cp), x.dtype),
        grid_spec=pl.GridSpec(
            # Batch axis innermost (fastest): the weight/bias block index is
            # constant across it, so those tiles are fetched once per class tile.
            grid=(grid_n, grid_m),
            in_specs=[
                pl.BlockSpec((TM, D), lambda j, i: (i, 0)),   # x tile, streamed
                pl.BlockSpec((D, TN), lambda j, i: (0, j)),   # W^T tile, resident per j
                pl.BlockSpec((1, TN), lambda j, i: (0, j)),   # bias tile, resident per j
            ],
            out_specs=pl.BlockSpec((TM, TN), lambda j, i: (i, j)),
        ),
        compiler_params=pltpu.CompilerParams(
            dimension_semantics=("parallel", "parallel"),
            vmem_limit_bytes=vmem_limit,
        ),
        cost_estimate=cost,
    )(x_p, w_t, b_p)

    y = y_p[:B, :C]
    return x, y


def xavier_normal(key, out_features, in_features, dtype=jnp.float32):
    # Matches torch.nn.init.xavier_normal_ (gain=1.0)
    std = math.sqrt(2.0 / (in_features + out_features))
    return std * jax.random.normal(key, (out_features, in_features), dtype=dtype)


if __name__ == "__main__":
    class_num = 10
    bottleneck_dim = 32
    batch = 8

    key = jax.random.PRNGKey(0)
    kx, kw, kx2, kw2 = jax.random.split(key, 4)

    x = jax.random.normal(kx, (batch, bottleneck_dim), dtype=jnp.float32)
    weight = xavier_normal(kw, class_num, bottleneck_dim)   # (C, D)
    bias = jnp.zeros((class_num,), dtype=jnp.float32)       # (C,)

    # 1) Pallas path at the module's nominal small shape (force past the fallback).
    fwd_pallas = jax.jit(functools.partial(feat_classifier_xy_forward, force_pallas=True))
    x_out, y_out = fwd_pallas(x, weight, bias)
    jax.block_until_ready((x_out, y_out))

    y_ref = x @ weight.T + bias
    assert x_out.shape == (batch, bottleneck_dim)
    assert y_out.shape == (batch, class_num)
    assert jnp.allclose(x_out, x)
    assert jnp.allclose(y_out, y_ref, atol=1e-5, rtol=1e-5)

    # 2) Larger check: exercises partial last batch tile (600 % 512 != 0) and
    #    class padding (200 -> 256) without inflating batch padding.
    B2, D2, C2 = 600, 96, 200
    x2 = jax.random.normal(kx2, (B2, D2), dtype=jnp.float32)
    w2 = xavier_normal(kw2, C2, D2)
    b2 = jnp.zeros((C2,), dtype=jnp.float32)
    x2_out, y2_out = fwd_pallas(x2, w2, b2)
    jax.block_until_ready((x2_out, y2_out))
    y2_ref = x2 @ w2.T + b2
    assert x2_out.shape == (B2, D2) and y2_out.shape == (B2, C2)
    assert jnp.allclose(y2_out, y2_ref, atol=1e-4, rtol=1e-4)

    # 3) Tiny-shape fallback path (plain jnp) also matches.
    fwd_auto = jax.jit(feat_classifier_xy_forward)
    xf, yf = fwd_auto(x, weight, bias)
    jax.block_until_ready((xf, yf))
    assert jnp.allclose(yf, y_ref, atol=1e-5, rtol=1e-5)

    print("KERNEL_OK")
</pallas_src>

<mosaic_0001>
module attributes {stable_mosaic.version = 11 : i64} {
  func.func @_linear_kernel(%arg0: i32, %arg1: i32, %arg2: memref<8x32xf32, #tpu.memory_space<vmem>>, %arg3: memref<32x128xf32, #tpu.memory_space<vmem>>, %arg4: memref<1x128xf32, #tpu.memory_space<vmem>>, %arg5: memref<8x128xf32, #tpu.memory_space<vmem>>) attributes {dimension_semantics = [#tpu.dimension_semantics<parallel>, #tpu.dimension_semantics<parallel>], iteration_bounds = array<i64: 1, 1>, scalar_prefetch = 0 : i64, scratch_operands = 0 : i64, tpu.core_type = #tpu.core_type<tc>, window_params = [{transform_indices = @transform_0, window_bounds = array<i64: 8, 32>}, {transform_indices = @transform_1, window_bounds = array<i64: 32, 128>}, {transform_indices = @transform_2, window_bounds = array<i64: 1, 128>}, {transform_indices = @transform_3, window_bounds = array<i64: 8, 128>}]} {
    %c0 = arith.constant 0 : index
    %c0_0 = arith.constant 0 : index
    %0 = vector.load %arg2[%c0, %c0_0] : memref<8x32xf32, #tpu.memory_space<vmem>>, vector<8x32xf32>
    %c0_1 = arith.constant 0 : index
    %c0_2 = arith.constant 0 : index
    %1 = vector.load %arg3[%c0_1, %c0_2] : memref<32x128xf32, #tpu.memory_space<vmem>>, vector<32x128xf32>
    %cst = arith.constant dense<0.000000e+00> : vector<8x128xf32>
    %2 = tpu.matmul %0, %1, %cst {dimension_numbers = #tpu.dot_dimension_numbers<[1], [0], [0], [1], [0, 0, 1, 1], [], []>} : vector<8x32xf32>, vector<32x128xf32>, vector<8x128xf32> -> vector<8x128xf32>
    %c0_3 = arith.constant 0 : index
    %c0_4 = arith.constant 0 : index
    %3 = vector.load %arg4[%c0_3, %c0_4] : memref<1x128xf32, #tpu.memory_space<vmem>>, vector<1x128xf32>
    %4 = vector.broadcast %3 : vector<1x128xf32> to vector<8x128xf32>
    %5 = arith.addf %2, %4 : vector<8x128xf32>
    %c0_5 = arith.constant 0 : index
    %c0_6 = arith.constant 0 : index
    %6 = vector.load %arg5[%c0_5, %c0_6] : memref<8x128xf32, #tpu.memory_space<vmem>>, vector<8x128xf32>
    tpu.vector_store %arg5[%c0_5, %c0_6], %5 {strides = array<i32>} : memref<8x128xf32, #tpu.memory_space<vmem>>, vector<8x128xf32>,
    return
  }
  func.func @transform_0(%arg0: i32, %arg1: i32) -> (i32, i32) {
    %c0_i32 = arith.constant 0 : i32
    %c0_i32_0 = arith.constant 0 : i32
    return %arg1, %c0_i32 : i32, i32
  }
  func.func @transform_1(%arg0: i32, %arg1: i32) -> (i32, i32) {
    %c0_i32 = arith.constant 0 : i32
    %c0_i32_0 = arith.constant 0 : i32
    return %c0_i32, %arg0 : i32, i32
  }
  func.func @transform_2(%arg0: i32, %arg1: i32) -> (i32, i32) {
    %c0_i32 = arith.constant 0 : i32
    %c0_i32_0 = arith.constant 0 : i32
    return %c0_i32, %arg0 : i32, i32
  }
  func.func @transform_3(%arg0: i32, %arg1: i32) -> (i32, i32) {
    %c0_i32 = arith.constant 0 : i32
    return %arg1, %arg0 : i32, i32
  }
}

</mosaic_0001>

<llo_original>
// kernel: feat_classifier_xy_forward.1
$region0: #{feat_classifier_xy_forward.1}
  #allocation0 [shape = 'u32[]', space=smem, size = 0x4, offset = 0x4, fixed_abs, tag = 'smem constant byte address 0x4 - core index']
  #allocation1 [shape = 'u32[144,128]{1,0:T(1,128)}', space=vmem, size = 0x12000, scoped, tag = 'internal scratch']
  %s0 = inlined_call_operand.vmem [shape: f32[8,32], index: 0, kind: input, shape index: {}]
  %s1 = inlined_call_operand.vmem [shape: f32[32,128], index: 1, kind: input, shape index: {}]
  %s2 = inlined_call_operand.vmem [shape: f32[1,128], index: 2, kind: input, shape index: {}]
  %s3 = inlined_call_operand.hbm [shape: f32[8,128], index: 3, kind: output, shape index: {}]
  %s4 = sld [smem:[#allocation0]]
  $region22: #{feat_classifier_xy_forward.1} parent=0
    _
  %s6 = ssub.s32 1, %s4
  %s7 = scalar_select 0, %s6, %s4
  $region1: #{feat_classifier_xy_forward.1} parent=0
    #allocation2 [shape = 'u8[4096]{0}', space=vmem, size = 0x1000, scoped, tag = 'output window, operand 0, single buffered']
    #allocation3 [shape = 's32[1]{0}', space=sflag, size = 0x4, scoped, tag = 'scoped memory for feat_classifier_xy_forward.1']
    %8 = vsyncpa [#allocation3], 0
    // Predicated region
    $region2: #{feat_classifier_xy_forward.1} parent=1 // pred_check
      _
    $region3: #{feat_classifier_xy_forward.1} parent=1 // pred_check_branch
      %10 = sbr.rel (0) target = $region5
    $region4: #{feat_classifier_xy_forward.1} parent=1 // pred_region
      _
    $region5: #{feat_classifier_xy_forward.1} parent=1 // pred_fallthru
      _
    // Predicated region
    $region6: #{feat_classifier_xy_forward.1} parent=1 // pred_check
      _
    $region7: #{feat_classifier_xy_forward.1} parent=1 // pred_check_branch
      %12 = sbr.rel (0) target = $region9
    $region8: #{feat_classifier_xy_forward.1} parent=1 // pred_region
      _
    $region9: #{feat_classifier_xy_forward.1} parent=1 // pred_fallthru
      _
    // Predicated region
    $region10: #{feat_classifier_xy_forward.1} parent=1 // pred_check
      _
    $region11: #{feat_classifier_xy_forward.1} parent=1 // pred_check_branch
      %14 = sbr.rel (0) target = $region13
    $region12: #{feat_classifier_xy_forward.1} parent=1 // pred_region
      _
    $region13: #{feat_classifier_xy_forward.1} parent=1 // pred_fallthru
      _
    %v15 = vld [vmem:[%s0] sm:$0xff]
    %v16 = vld [vmem:[%s1] sm:$0xff]
    %v17 = vld [vmem:[%s1 + $0x8] sm:$0xff]
    %v18 = vld [vmem:[%s1 + $0x10] sm:$0xff]
    %v19 = vld [vmem:[%s1 + $0x18] sm:$0xff]
    %v20 = vld [vmem:[%s2] sm:$0x1]
    %v22 = vlaneseq
    %v23 = vshrl.u32 %v22, 7
    %v24 = vsub.s32 0, %v23
    %v25 = vrot.slane %v20, %v24
    %vm27 = vcmask 261120
    %v29 = vsel %vm27, %v15, 0
    %31 = vmatprep.subr.mxu0 0.0
    %32 = vmatpush1.msra.mxu0 0.0
    %33 = vmatprep.subr.mxu0 0.0
    %34 = vmatpush1.msra.mxu0 0.0
    %35 = vmatprep.subr.mxu0 0.0
    %36 = vmatpush1.msra.mxu0 0.0
    %37 = vmatprep.subr.mxu0 0.0
    %38 = vmatpush1.msra.mxu0 0.0
    %39 = vmatprep.subr.mxu0 0.0
    %40 = vmatpush1.msra.mxu0 0.0
    %41 = vmatprep.subr.mxu0 0.0
    %42 = vmatpush1.msra.mxu0 0.0
    %43 = vmatprep.subr.mxu0 0.0
    %44 = vmatpush1.msra.mxu0 0.0
    %45 = vmatprep.subr.mxu0 0.0
    %46 = vmatpush1.msra.mxu0 0.0
    %47 = vmatprep.subr.mxu0 0.0
    %48 = vmatpush1.msra.mxu0 0.0
    %49 = vmatprep.subr.mxu0 0.0
    %50 = vmatpush1.msra.mxu0 0.0
    %51 = vmatprep.subr.mxu0 0.0
    %52 = vmatpush1.msra.mxu0 0.0
    %53 = vmatprep.subr.mxu0 0.0
    %54 = vmatpush1.msra.mxu0 0.0
    %55 = vmatprep.subr.mxu0 0.0
    %56 = vmatpush1.msra.mxu0 %v19
    %57 = vmatprep.subr.mxu0 0.0
    %58 = vmatpush1.msra.mxu0 %v18
    %59 = vmatprep.subr.mxu0 0.0
    %60 = vmatpush1.msra.mxu0 %v17
    %61 = vmatprep.subr.mxu0 0.0
    %62 = vmatpush1.msra.mxu0 %v16
    %63 = vmatprep.subr.mxu0 0.0
    %64 = vmatpush2.msra.mxu0 0.0
    %65 = vmatprep.subr.mxu0 0.0
    %66 = vmatpush2.msra.mxu0 0.0
    %67 = vmatprep.subr.mxu0 0.0
    %68 = vmatpush2.msra.mxu0 0.0
    %69 = vmatprep.subr.mxu0 0.0
    %70 = vmatpush2.msra.mxu0 0.0
    %71 = vmatprep.subr.mxu0 0.0
    %72 = vmatpush2.msra.mxu0 0.0
    %73 = vmatprep.subr.mxu0 0.0
    %74 = vmatpush2.msra.mxu0 0.0
    %75 = vmatprep.subr.mxu0 0.0
    %76 = vmatpush2.msra.mxu0 0.0
    %77 = vmatprep.subr.mxu0 0.0
    %78 = vmatpush2.msra.mxu0 0.0
    %79 = vmatprep.subr.mxu0 0.0
    %80 = vmatpush2.msra.mxu0 0.0
    %81 = vmatprep.subr.mxu0 0.0
    %82 = vmatpush2.msra.mxu0 0.0
    %83 = vmatprep.subr.mxu0 0.0
    %84 = vmatpush2.msra.mxu0 0.0
    %85 = vmatprep.subr.mxu0 0.0
    %86 = vmatpush2.msra.mxu0 0.0
    %87 = vmatprep.subr.mxu0 0.0
    %88 = vmatpush2.msra.mxu0 0.0
    %89 = vmatprep.subr.mxu0 0.0
    %90 = vmatpush2.msra.mxu0 0.0
    %91 = vmatprep.subr.mxu0 0.0
    %92 = vmatpush2.msra.mxu0 0.0
    %93 = vmatprep.subr.mxu0 0.0
    %94 = vmatpush2.msra.mxu0 0.0
    %95 = vmatprep.mubr.f32.mxu0 0.0
    %96 = vmatmul.mubr.f32.gmra.mxu0 %v29
    %v97 = vpop.f32.mrf.mxu0
    %v98 = vadd.f32 %v25, %v97
    %v99 = vpop.f32.mrf.mxu0
    %100 = vdwg.mxu0
    %101 = vst [vmem:[#allocation2] sm:$0xff] %v98
    // Predicated region
    $region14: #{feat_classifier_xy_forward.1} parent=1 // pred_check
      _
    $region15: #{feat_classifier_xy_forward.1} parent=1 // pred_check_branch
      %103 = sbr.rel (0) target = $region17
    $region16: #{feat_classifier_xy_forward.1} parent=1 // pred_region
      %s105 = ssub.s32 128, 128
      %106 = vsyncadd [#allocation3], %s105
      %s108 = sshll.u32 [#allocation2], 4
      %s109 = int_to_ptr.vmem [resolvable:$true] %s108
      %111 = dma.vmem_to_hbm [thread:$0]  %s109, 128, %s3, [#allocation3]
    $region17: #{feat_classifier_xy_forward.1} parent=1 // pred_fallthru
      _
    // Predicated region
    $region18: #{feat_classifier_xy_forward.1} parent=1 // pred_check
      _
    $region19: #{feat_classifier_xy_forward.1} parent=1 // pred_check_branch
      %113 = sbr.rel (0) target = $region21
    $region20: #{feat_classifier_xy_forward.1} parent=1 // pred_region
      %114 = dma.done [#allocation3], 128
    $region21: #{feat_classifier_xy_forward.1} parent=1 // pred_fallthru
      _
    %115 = vsyncpa [#allocation3], 1

</llo_original>
